<compile_context>
chip_gen: v7x
topology: tpu7x:2x2x1
jax: 0.10.0
libtpu: 0.0.40
codegen_flags: <defaults>
</compile_context>

<pallas_src>
import math
import functools

import jax
import jax.numpy as jnp
from jax.experimental import pallas as pl
from jax.experimental.pallas import tpu as pltpu

F32 = jnp.float32

_TM = 256                       # target rows per tile (v7x-safe; fine on v5e/v6e)
_VMEM_LIMIT = 48 * 1024 * 1024  # scoped-VMEM ceiling; headroom on v7x's 64 MiB


def _round_up(x, m):
    return (x + m - 1) // m * m


def _pick_row_tile(m_rows, target=_TM):
    """Row tile: multiple of 8, <= target, and yielding >= 2 grid steps when
    possible so both v7x TensorCores get work even on short sequences."""
    mp = _round_up(m_rows, 8)
    half = _round_up(pl.cdiv(mp, 2), 8)
    return max(8, min(target, half))


def _mlm_head_kernel(x_ref, w1_ref, b1_ref, g_ref, bb_ref, w2_ref, b2_ref,
                     o_ref, *, eps):
    """Fused dense -> erf-GELU -> LayerNorm -> decoder for one (tm, H) row tile."""
    # Dense: operands stay in their native dtype (bf16 -> MXU bf16 path),
    # accumulation in f32.
    h = jnp.dot(x_ref[...], w1_ref[...], preferred_element_type=F32)
    h = h + b1_ref[...].astype(F32)

    # erf-GELU, matches ACT2FN['gelu']: x * 0.5 * (1 + erf(x / sqrt(2)))
    h = h * 0.5 * (1.0 + jax.lax.erf(h * (1.0 / math.sqrt(2.0))))

    # LayerNorm over the full (untiled) feature dim; single-pass statistics.
    mu = jnp.mean(h, axis=-1, keepdims=True)
    ms = jnp.mean(h * h, axis=-1, keepdims=True)
    var = jnp.maximum(ms - mu * mu, 0.0)
    y = (h - mu) * jax.lax.rsqrt(var + eps)
    y = y * g_ref[...].astype(F32) + bb_ref[...].astype(F32)

    # Decoder: cast the well-scaled LN output down to the weight dtype so the
    # second matmul also uses the MXU's native (bf16) path when applicable.
    scores = jnp.dot(y.astype(w2_ref.dtype), w2_ref[...],
                     preferred_element_type=F32)
    o_ref[...] = (scores + b2_ref[...].astype(F32)).astype(o_ref.dtype)


def visual_only_mlm_head(params, sequence_output, *, eps=1e-12):
    """VisualOnlyMLMHead.forward(sequence_output) -> prediction_scores.

    Weights use (in, out) layout, i.e. the torch weights transposed once at
    load time.  Pass bf16 params + activations for the fast path; matmul
    accumulation and LayerNorm math stay in f32 either way.
    """
    lead = sequence_output.shape[:-1]
    H = sequence_output.shape[-1]
    N = params["dec_w"].shape[1]
    x = sequence_output.reshape(-1, H)
    M = x.shape[0]

    # TODO(synk): for hidden sizes where dense_w/dec_w no longer fit VMEM
    # (H >~ 2048 in f32), reintroduce a K grid axis with an f32 accumulator.
    tm = _pick_row_tile(M)
    Mp = _round_up(M, tm)
    if Mp != M:                       # pad once; no-op in the common case
        x = jnp.pad(x, ((0, Mp - M), (0, 0)))

    # Constant index_maps -> dense_w / dec_w / biases are DMA'd once and stay
    # VMEM-resident across all M tiles.
    # TODO(synk): on v7x add pipeline_mode=pl.Buffered(1) to the constant
    # weight specs to avoid paying double buffers for blocks that never change.
    out = pl.pallas_call(
        functools.partial(_mlm_head_kernel, eps=eps),
        out_shape=jax.ShapeDtypeStruct((Mp, N), sequence_output.dtype),
        grid=(Mp // tm,),
        in_specs=[
            pl.BlockSpec((tm, H), lambda i: (i, 0)),    # x tile
            pl.BlockSpec((H, H), lambda i: (0, 0)),     # dense_w  (resident)
            pl.BlockSpec((1, H), lambda i: (0, 0)),     # dense_b
            pl.BlockSpec((1, H), lambda i: (0, 0)),     # ln gamma
            pl.BlockSpec((1, H), lambda i: (0, 0)),     # ln beta
            pl.BlockSpec((H, N), lambda i: (0, 0)),     # dec_w    (resident)
            pl.BlockSpec((1, N), lambda i: (0, 0)),     # dec_b
        ],
        out_specs=pl.BlockSpec((tm, N), lambda i: (i, 0)),  # lane-dense 1536
        compiler_params=pltpu.CompilerParams(
            dimension_semantics=("parallel",),
            vmem_limit_bytes=_VMEM_LIMIT),
    )(x,
      params["dense_w"], params["dense_b"].reshape(1, H),
      params["ln_g"].reshape(1, H), params["ln_b"].reshape(1, H),
      params["dec_w"], params["dec_b"].reshape(1, N))

    if Mp != M:
        out = out[:M]
    return out.reshape(lead + (N,))


def _reference(params, x, eps=1e-12):
    """Plain-JAX f32 reference of the same forward pass (correctness check)."""
    h = x @ params["dense_w"] + params["dense_b"]
    h = h * 0.5 * (1.0 + jax.lax.erf(h / math.sqrt(2.0)))
    mu = h.mean(-1, keepdims=True)
    var = jnp.mean(jnp.square(h - mu), -1, keepdims=True)
    h = (h - mu) * jax.lax.rsqrt(var + eps) * params["ln_g"] + params["ln_b"]
    return h @ params["dec_w"] + params["dec_b"]


if __name__ == "__main__":
    H = 32            # config.hidden_size (small demo size)
    OUT = 1536        # hardcoded decoder width in VisualLMPredictionHead
    B, S = 2, 8       # batch, sequence length
    EPS = 1e-12       # config.layer_norm_eps

    root = jax.random.PRNGKey(0)
    k_x, k_w1, k_b1, k_w2 = jax.random.split(root, 4)
    params = dict(
        dense_w=jax.random.normal(k_w1, (H, H), F32) * 0.02,   # (in, out) layout
        dense_b=jax.random.normal(k_b1, (H,), F32) * 0.02,
        ln_g=jnp.ones((H,), F32),
        ln_b=jnp.zeros((H,), F32),
        dec_w=jax.random.normal(k_w2, (H, OUT), F32) * 0.02,
        dec_b=jnp.zeros((OUT,), F32),   # decoder.bias = nn.Parameter(torch.zeros(1536))
    )
    sequence_output = jax.random.normal(k_x, (B, S, H), F32)

    fwd = jax.jit(functools.partial(visual_only_mlm_head, eps=EPS))

    # f32 path: strict check against the f32 reference.
    scores = fwd(params, sequence_output)
    jax.block_until_ready(scores)
    assert scores.shape == (B, S, OUT)
    ref = _reference(params, sequence_output.reshape(-1, H), eps=EPS).reshape(B, S, OUT)
    err32 = float(jnp.max(jnp.abs(scores - ref)))
    assert jnp.allclose(scores, ref, atol=1e-4, rtol=1e-4), err32

    # bf16 fast path (native-dtype operands -> MXU bf16, half HBM traffic):
    # f32 accumulation/LN keeps it close to the f32 reference.
    params_bf16 = jax.tree_util.tree_map(lambda p: p.astype(jnp.bfloat16), params)
    scores_bf16 = fwd(params_bf16, sequence_output.astype(jnp.bfloat16))
    jax.block_until_ready(scores_bf16)
    err16 = float(jnp.max(jnp.abs(scores_bf16.astype(F32) - ref)))
    assert jnp.allclose(scores_bf16.astype(F32), ref, atol=2e-2, rtol=2e-2), err16

    print("KERNEL_OK")
</pallas_src>

<mosaic_0001>
module attributes {stable_mosaic.version = 11 : i64} {
  func.func @_mlm_head_kernel(%arg0: i32, %arg1: memref<8x32xf32, #tpu.memory_space<vmem>>, %arg2: memref<32x32xf32, #tpu.memory_space<vmem>>, %arg3: memref<1x32xf32, #tpu.memory_space<vmem>>, %arg4: memref<1x32xf32, #tpu.memory_space<vmem>>, %arg5: memref<1x32xf32, #tpu.memory_space<vmem>>, %arg6: memref<32x1536xf32, #tpu.memory_space<vmem>>, %arg7: memref<1x1536xf32, #tpu.memory_space<vmem>>, %arg8: memref<8x1536xf32, #tpu.memory_space<vmem>>) attributes {dimension_semantics = [#tpu.dimension_semantics<parallel>], iteration_bounds = array<i64: 2>, scalar_prefetch = 0 : i64, scratch_operands = 0 : i64, tpu.core_type = #tpu.core_type<tc>, window_params = [{transform_indices = @transform_0, window_bounds = array<i64: 8, 32>}, {pipeline_mode = #tpu.pipeline_mode<synchronous>, transform_indices = @transform_1, window_bounds = array<i64: 32, 32>}, {pipeline_mode = #tpu.pipeline_mode<synchronous>, transform_indices = @transform_2, window_bounds = array<i64: 1, 32>}, {pipeline_mode = #tpu.pipeline_mode<synchronous>, transform_indices = @transform_3, window_bounds = array<i64: 1, 32>}, {pipeline_mode = #tpu.pipeline_mode<synchronous>, transform_indices = @transform_4, window_bounds = array<i64: 1, 32>}, {pipeline_mode = #tpu.pipeline_mode<synchronous>, transform_indices = @transform_5, window_bounds = array<i64: 32, 1536>}, {pipeline_mode = #tpu.pipeline_mode<synchronous>, transform_indices = @transform_6, window_bounds = array<i64: 1, 1536>}, {transform_indices = @transform_7, window_bounds = array<i64: 8, 1536>}]} {
    %c0 = arith.constant 0 : index
    %c0_0 = arith.constant 0 : index
    %0 = vector.load %arg1[%c0, %c0_0] : memref<8x32xf32, #tpu.memory_space<vmem>>, vector<8x32xf32>
    %c0_1 = arith.constant 0 : index
    %c0_2 = arith.constant 0 : index
    %1 = vector.load %arg2[%c0_1, %c0_2] : memref<32x32xf32, #tpu.memory_space<vmem>>, vector<32x32xf32>
    %cst = arith.constant dense<0.000000e+00> : vector<8x32xf32>
    %2 = tpu.matmul %0, %1, %cst {dimension_numbers = #tpu.dot_dimension_numbers<[1], [0], [0], [1], [0, 0, 1, 1], [], []>} : vector<8x32xf32>, vector<32x32xf32>, vector<8x32xf32> -> vector<8x32xf32>
    %c0_3 = arith.constant 0 : index
    %c0_4 = arith.constant 0 : index
    %3 = vector.load %arg3[%c0_3, %c0_4] : memref<1x32xf32, #tpu.memory_space<vmem>>, vector<1x32xf32>
    %4 = vector.broadcast %3 : vector<1x32xf32> to vector<8x32xf32>
    %5 = arith.addf %2, %4 : vector<8x32xf32>
    %cst_5 = arith.constant 5.000000e-01 : f32
    %6 = vector.broadcast %cst_5 : f32 to vector<8x32xf32>
    %7 = arith.mulf %5, %6 : vector<8x32xf32>
    %cst_6 = arith.constant 0.707106769 : f32
    %8 = vector.broadcast %cst_6 : f32 to vector<8x32xf32>
    %9 = arith.mulf %5, %8 : vector<8x32xf32>
    %10 = math.erf %9 : vector<8x32xf32>
    %cst_7 = arith.constant 1.000000e+00 : f32
    %11 = vector.broadcast %cst_7 : f32 to vector<8x32xf32>
    %12 = arith.addf %11, %10 : vector<8x32xf32>
    %13 = arith.mulf %7, %12 : vector<8x32xf32>
    %cst_8 = arith.constant dense<0.000000e+00> : vector<8xf32>
    %14 = vector.multi_reduction <add>, %13, %cst_8 [1] : vector<8x32xf32> to vector<8xf32>
    %15 = vector.shape_cast %14 : vector<8xf32> to vector<8x1xf32>
    %cst_9 = arith.constant 3.200000e+01 : f32
    %16 = vector.broadcast %cst_9 : f32 to vector<8x1xf32>
    %17 = arith.divf %15, %16 : vector<8x1xf32>
    %18 = arith.mulf %13, %13 : vector<8x32xf32>
    %cst_10 = arith.constant dense<0.000000e+00> : vector<8xf32>
    %19 = vector.multi_reduction <add>, %18, %cst_10 [1] : vector<8x32xf32> to vector<8xf32>
    %20 = vector.shape_cast %19 : vector<8xf32> to vector<8x1xf32>
    %cst_11 = arith.constant 3.200000e+01 : f32
    %21 = vector.broadcast %cst_11 : f32 to vector<8x1xf32>
    %22 = arith.divf %20, %21 : vector<8x1xf32>
    %23 = arith.mulf %17, %17 : vector<8x1xf32>
    %24 = arith.subf %22, %23 : vector<8x1xf32>
    %cst_12 = arith.constant 0.000000e+00 : f32
    %25 = vector.broadcast %cst_12 : f32 to vector<8x1xf32>
    %26 = arith.maximumf %24, %25 : vector<8x1xf32>
    %27 = vector.broadcast %17 : vector<8x1xf32> to vector<8x32xf32>
    %28 = arith.subf %13, %27 : vector<8x32xf32>
    %cst_13 = arith.constant 9.99999996E-13 : f32
    %29 = vector.broadcast %cst_13 : f32 to vector<8x1xf32>
    %30 = arith.addf %26, %29 : vector<8x1xf32>
    %31 = math.rsqrt %30 : vector<8x1xf32>
    %32 = vector.broadcast %31 : vector<8x1xf32> to vector<8x32xf32>
    %33 = arith.mulf %28, %32 : vector<8x32xf32>
    %c0_14 = arith.constant 0 : index
    %c0_15 = arith.constant 0 : index
    %34 = vector.load %arg4[%c0_14, %c0_15] : memref<1x32xf32, #tpu.memory_space<vmem>>, vector<1x32xf32>
    %35 = vector.broadcast %34 : vector<1x32xf32> to vector<8x32xf32>
    %36 = arith.mulf %33, %35 : vector<8x32xf32>
    %c0_16 = arith.constant 0 : index
    %c0_17 = arith.constant 0 : index
    %37 = vector.load %arg5[%c0_16, %c0_17] : memref<1x32xf32, #tpu.memory_space<vmem>>, vector<1x32xf32>
    %38 = vector.broadcast %37 : vector<1x32xf32> to vector<8x32xf32>
    %39 = arith.addf %36, %38 : vector<8x32xf32>
    %c0_18 = arith.constant 0 : index
    %c0_19 = arith.constant 0 : index
    %40 = vector.load %arg6[%c0_18, %c0_19] : memref<32x1536xf32, #tpu.memory_space<vmem>>, vector<32x1536xf32>
    %cst_20 = arith.constant dense<0.000000e+00> : vector<8x1536xf32>
    %41 = tpu.matmul %39, %40, %cst_20 {dimension_numbers = #tpu.dot_dimension_numbers<[1], [0], [0], [1], [0, 0, 1, 1], [], []>} : vector<8x32xf32>, vector<32x1536xf32>, vector<8x1536xf32> -> vector<8x1536xf32>
    %c0_21 = arith.constant 0 : index
    %c0_22 = arith.constant 0 : index
    %42 = vector.load %arg7[%c0_21, %c0_22] : memref<1x1536xf32, #tpu.memory_space<vmem>>, vector<1x1536xf32>
    %43 = vector.broadcast %42 : vector<1x1536xf32> to vector<8x1536xf32>
    %44 = arith.addf %41, %43 : vector<8x1536xf32>
    %c0_23 = arith.constant 0 : index
    %c0_24 = arith.constant 0 : index
    %45 = vector.load %arg8[%c0_23, %c0_24] : memref<8x1536xf32, #tpu.memory_space<vmem>>, vector<8x1536xf32>
    tpu.vector_store %arg8[%c0_23, %c0_24], %44 {strides = array<i32>} : memref<8x1536xf32, #tpu.memory_space<vmem>>, vector<8x1536xf32>,
    return
  }
  func.func @transform_0(%arg0: i32) -> (i32, i32) {
    %c0_i32 = arith.constant 0 : i32
    %c0_i32_0 = arith.constant 0 : i32
    return %arg0, %c0_i32 : i32, i32
  }
  func.func @transform_1(%arg0: i32) -> (i32, i32) {
    %c0_i32 = arith.constant 0 : i32
    %c0_i32_0 = arith.constant 0 : i32
    %c0_i32_1 = arith.constant 0 : i32
    return %c0_i32, %c0_i32_0 : i32, i32
  }
  func.func @transform_2(%arg0: i32) -> (i32, i32) {
    %c0_i32 = arith.constant 0 : i32
    %c0_i32_0 = arith.constant 0 : i32
    %c0_i32_1 = arith.constant 0 : i32
    return %c0_i32, %c0_i32_0 : i32, i32
  }
  func.func @transform_3(%arg0: i32) -> (i32, i32) {
    %c0_i32 = arith.constant 0 : i32
    %c0_i32_0 = arith.constant 0 : i32
    %c0_i32_1 = arith.constant 0 : i32
    return %c0_i32, %c0_i32_0 : i32, i32
  }
  func.func @transform_4(%arg0: i32) -> (i32, i32) {
    %c0_i32 = arith.constant 0 : i32
    %c0_i32_0 = arith.constant 0 : i32
    %c0_i32_1 = arith.constant 0 : i32
    return %c0_i32, %c0_i32_0 : i32, i32
  }
  func.func @transform_5(%arg0: i32) -> (i32, i32) {
    %c0_i32 = arith.constant 0 : i32
    %c0_i32_0 = arith.constant 0 : i32
    %c0_i32_1 = arith.constant 0 : i32
    return %c0_i32, %c0_i32_0 : i32, i32
  }
  func.func @transform_6(%arg0: i32) -> (i32, i32) {
    %c0_i32 = arith.constant 0 : i32
    %c0_i32_0 = arith.constant 0 : i32
    %c0_i32_1 = arith.constant 0 : i32
    return %c0_i32, %c0_i32_0 : i32, i32
  }
  func.func @transform_7(%arg0: i32) -> (i32, i32) {
    %c0_i32 = arith.constant 0 : i32
    %c0_i32_0 = arith.constant 0 : i32
    return %arg0, %c0_i32 : i32, i32
  }
}

</mosaic_0001>

<llo_original>
// kernel: visual_only_mlm_head.1
$region0: #{visual_only_mlm_head.1}
  #allocation0 [shape = 'u32[]', space=smem, size = 0x4, offset = 0x4, fixed_abs, tag = 'smem constant byte address 0x4 - core index']
  #allocation1 [shape = 'u32[144,128]{1,0:T(1,128)}', space=vmem, size = 0x12000, scoped, tag = 'internal scratch']
  %s0 = inlined_call_operand.vmem [shape: f32[16,32], index: 0, kind: input, shape index: {}]
  %s1 = inlined_call_operand.vmem [shape: f32[32,32], index: 1, kind: input, shape index: {}]
  %s2 = inlined_call_operand.vmem [shape: f32[1,32], index: 2, kind: input, shape index: {}]
  %s3 = inlined_call_operand.vmem [shape: f32[1,32], index: 3, kind: input, shape index: {}]
  %s4 = inlined_call_operand.vmem [shape: f32[1,32], index: 4, kind: input, shape index: {}]
  %s5 = inlined_call_operand.hbm [shape: f32[32,1536], index: 5, kind: input, shape index: {}]
  %s6 = inlined_call_operand.vmem [shape: f32[1,1536], index: 6, kind: input, shape index: {}]
  %s7 = inlined_call_operand.hbm [shape: f32[16,1536], index: 7, kind: output, shape index: {}]
  %s8 = sld [smem:[#allocation0]]
  $region65: #{visual_only_mlm_head.1} parent=0
    _
  %s10 = ssub.s32 1, %s8
  %s11 = scalar_select 0, %s10, %s8
  $region1: #{visual_only_mlm_head.1} parent=0
    #allocation2 [shape = 'u8[196608]{0}', space=vmem, size = 0x30000, scoped, tag = 'input window, operand 5, single buffered']
    #allocation3 [shape = 's32[2]{0}', space=sflag, size = 0x8, scoped, tag = 'scoped memory for visual_only_mlm_head.1']
    #allocation4 [shape = 's32[2]{0}', space=sflag, size = 0x8, scoped, tag = 'scoped memory for visual_only_mlm_head.1']
    #allocation5 [shape = 'u8[98304]{0}', space=vmem, size = 0x18000, scoped, tag = 'output window, operand 0']
    %12 = vsyncpa [#allocation3], 0
    %13 = vsyncpa [#allocation4], 0
    %s14 = scalar_lea.sflag [#allocation4], 1
    %15 = vsyncpa %s14, 0
    loop: start=0, step=1, limit=4
    $region2: #{visual_only_mlm_head.1} parent=1 // loop_pre_header
      _
    $region3: #{visual_only_mlm_head.1} parent=1 // loop_header
      %s17 = sphi 0, %s21
      %p18 = scmp.ge.s32.totalorder %s17, 4
      %s27 = sphi 0, %s29
      %s30 = sphi 0, %s27
      %s31 = sphi 0, %s30
      %s47 = sphi 0, %s31
      %s51 = sphi 0, %s51
      %s53 = sphi 0, %s51
      %s54 = sphi 0, %s53
      %s68 = sphi 0, %s54
      %s72 = sphi 0, %s72
      %s74 = sphi 0, %s72
      %s75 = sphi 0, %s74
      %s89 = sphi 0, %s75
      %s93 = sphi 0, %s93
      %s95 = sphi 0, %s93
      %s96 = sphi 0, %s95
      %s110 = sphi 0, %s96
      %s114 = sphi 0, %s114
      %s116 = sphi 0, %s114
      %s117 = sphi 0, %s116
      %s131 = sphi 0, %s117
      %s135 = sphi 0, %s135
      %s137 = sphi 0, %s135
      %s138 = sphi 0, %s137
      %s152 = sphi 0, %s138
      %s156 = sphi 0, %s156
      %s158 = sphi 0, %s156
      %s159 = sphi 0, %s158
      %s173 = sphi 0, %s159
      %s179 = sphi 0, %s181
      %s182 = sphi 0, %s179
      %s183 = sphi 0, %s182
      %s199 = sphi 0, %s183
    $region4: #{visual_only_mlm_head.1} parent=1 // loop_header_branch
      %20 = sbr.rel (%p18) target = $region8
    $region5: #{visual_only_mlm_head.1} parent=1 // loop_body
      %s22 = ssub.s32 %s17, 1
      %s23 = ssub.s32 %s17, 2
      %s24 = sadd.s32 %s17, 1
      %s25 = ssub.s32 %s17, %s24
      %p26 = scmp.eq.s32.totalorder %s25, 0
      %s28 = sadd.s32 %s27, 1
      %s29 = scalar_select %p26, %s27, %s28
      %p32 = pneg %p26
      %p33 = scmp.eq.s32.totalorder %s17, 1
      %p34 = por %p32, %p33
      %p35 = scmp.ne.s32.totalorder %s27, %s30
      %p36 = scmp.eq.s32.totalorder %s17, 0
      %p37 = por %p35, %p36
      %p38 = scmp.ne.s32.totalorder %s27, %s30
      %p39 = scmp.eq.s32.totalorder %s22, 1
      %p40 = por %p38, %p39
      %p41 = scmp.ne.s32.totalorder %s30, %s31
      %p42 = scmp.eq.s32.totalorder %s22, 0
      %p43 = por %p41, %p42
      %p44 = scmp.ne.s32.totalorder %s30, %s31
      %p45 = scmp.eq.s32.totalorder %s23, 1
      %p46 = por %p44, %p45
      %p48 = scmp.ne.s32.totalorder %s31, %s47
      %p49 = scmp.eq.s32.totalorder %s23, 0
      %p50 = por %p48, %p49
      %s52 = sadd.s32 %s51, 1
      %p55 = scmp.eq.s32.totalorder %s17, 1
      %p56 = scmp.ne.s32.totalorder %s51, %s53
      %p57 = scmp.eq.s32.totalorder %s17, 0
      %p58 = por %p56, %p57
      %p59 = scmp.ne.s32.totalorder %s51, %s53
      %p60 = scmp.eq.s32.totalorder %s22, 1
      %p61 = por %p59, %p60
      %p62 = scmp.ne.s32.totalorder %s53, %s54
      %p63 = scmp.eq.s32.totalorder %s22, 0
      %p64 = por %p62, %p63
      %p65 = scmp.ne.s32.totalorder %s53, %s54
      %p66 = scmp.eq.s32.totalorder %s23, 1
      %p67 = por %p65, %p66
      %p69 = scmp.ne.s32.totalorder %s54, %s68
      %p70 = scmp.eq.s32.totalorder %s23, 0
      %p71 = por %p69, %p70
      %s73 = sadd.s32 %s72, 1
      %p76 = scmp.eq.s32.totalorder %s17, 1
      %p77 = scmp.ne.s32.totalorder %s72, %s74
      %p78 = scmp.eq.s32.totalorder %s17, 0
      %p79 = por %p77, %p78
      %p80 = scmp.ne.s32.totalorder %s72, %s74
      %p81 = scmp.eq.s32.totalorder %s22, 1
      %p82 = por %p80, %p81
      %p83 = scmp.ne.s32.totalorder %s74, %s75
      %p84 = scmp.eq.s32.totalorder %s22, 0
      %p85 = por %p83, %p84
      %p86 = scmp.ne.s32.totalorder %s74, %s75
      %p87 = scmp.eq.s32.totalorder %s23, 1
      %p88 = por %p86, %p87
      %p90 = scmp.ne.s32.totalorder %s75, %s89
      %p91 = scmp.eq.s32.totalorder %s23, 0
      %p92 = por %p90, %p91
      %s94 = sadd.s32 %s93, 1
      %p97 = scmp.eq.s32.totalorder %s17, 1
      %p98 = scmp.ne.s32.totalorder %s93, %s95
      %p99 = scmp.eq.s32.totalorder %s17, 0
      %p100 = por %p98, %p99
      %p101 = scmp.ne.s32.totalorder %s93, %s95
      %p102 = scmp.eq.s32.totalorder %s22, 1
      %p103 = por %p101, %p102
      %p104 = scmp.ne.s32.totalorder %s95, %s96
      %p105 = scmp.eq.s32.totalorder %s22, 0
      %p106 = por %p104, %p105
      %p107 = scmp.ne.s32.totalorder %s95, %s96
      %p108 = scmp.eq.s32.totalorder %s23, 1
      %p109 = por %p107, %p108
      %p111 = scmp.ne.s32.totalorder %s96, %s110
      %p112 = scmp.eq.s32.totalorder %s23, 0
      %p113 = por %p111, %p112
      %s115 = sadd.s32 %s114, 1
      %p118 = scmp.eq.s32.totalorder %s17, 1
      %p119 = scmp.ne.s32.totalorder %s114, %s116
      %p120 = scmp.eq.s32.totalorder %s17, 0
      %p121 = por %p119, %p120
      %p122 = scmp.ne.s32.totalorder %s114, %s116
      %p123 = scmp.eq.s32.totalorder %s22, 1
      %p124 = por %p122, %p123
      %p125 = scmp.ne.s32.totalorder %s116, %s117
      %p126 = scmp.eq.s32.totalorder %s22, 0
      %p127 = por %p125, %p126
      %p128 = scmp.ne.s32.totalorder %s116, %s117
      %p129 = scmp.eq.s32.totalorder %s23, 1
      %p130 = por %p128, %p129
      %p132 = scmp.ne.s32.totalorder %s117, %s131
      %p133 = scmp.eq.s32.totalorder %s23, 0
      %p134 = por %p132, %p133
      %s136 = sadd.s32 %s135, 1
      %p139 = scmp.eq.s32.totalorder %s17, 1
      %p140 = scmp.ne.s32.totalorder %s135, %s137
      %p141 = scmp.eq.s32.totalorder %s17, 0
      %p142 = por %p140, %p141
      %p143 = scmp.ne.s32.totalorder %s135, %s137
      %p144 = scmp.eq.s32.totalorder %s22, 1
      %p145 = por %p143, %p144
      %p146 = scmp.ne.s32.totalorder %s137, %s138
      %p147 = scmp.eq.s32.totalorder %s22, 0
      %p148 = por %p146, %p147
      %p149 = scmp.ne.s32.totalorder %s137, %s138
      %p150 = scmp.eq.s32.totalorder %s23, 1
      %p151 = por %p149, %p150
      %p153 = scmp.ne.s32.totalorder %s138, %s152
      %p154 = scmp.eq.s32.totalorder %s23, 0
      %p155 = por %p153, %p154
      %s157 = sadd.s32 %s156, 1
      %p160 = scmp.eq.s32.totalorder %s17, 1
      %p161 = scmp.ne.s32.totalorder %s156, %s158
      %p162 = scmp.eq.s32.totalorder %s17, 0
      %p163 = por %p161, %p162
      %p164 = scmp.ne.s32.totalorder %s156, %s158
      %p165 = scmp.eq.s32.totalorder %s22, 1
      %p166 = por %p164, %p165
      %p167 = scmp.ne.s32.totalorder %s158, %s159
      %p168 = scmp.eq.s32.totalorder %s22, 0
      %p169 = por %p167, %p168
      %p170 = scmp.ne.s32.totalorder %s158, %s159
      %p171 = scmp.eq.s32.totalorder %s23, 1
      %p172 = por %p170, %p171
      %p174 = scmp.ne.s32.totalorder %s159, %s173
      %p175 = scmp.eq.s32.totalorder %s23, 0
      %p176 = por %p174, %p175
      %s177 = ssub.s32 %s17, %s24
      %p178 = scmp.eq.s32.totalorder %s177, 0
      %s180 = sadd.s32 %s179, 1
      %s181 = scalar_select %p178, %s179, %s180
      %p184 = pneg %p178
      %p185 = scmp.eq.s32.totalorder %s17, 1
      %p186 = por %p184, %p185
      %p187 = scmp.ne.s32.totalorder %s179, %s182
      %p188 = scmp.eq.s32.totalorder %s17, 0
      %p189 = por %p187, %p188
      %p190 = scmp.ne.s32.totalorder %s179, %s182
      %p191 = scmp.eq.s32.totalorder %s22, 1
      %p192 = por %p190, %p191
      %p193 = scmp.ne.s32.totalorder %s182, %s183
      %p194 = scmp.eq.s32.totalorder %s22, 0
      %p195 = por %p193, %p194
      %p196 = scmp.ne.s32.totalorder %s182, %s183
      %p197 = scmp.eq.s32.totalorder %s23, 1
      %p198 = por %p196, %p197
      %p200 = scmp.ne.s32.totalorder %s183, %s199
      %p201 = scmp.eq.s32.totalorder %s23, 0
      %p202 = por %p200, %p201
      %p203 = scmp.le.s32.totalorder 1, %s17
      %p204 = scmp.lt.s32.totalorder %s17, 3
      %p205 = pnand %p203, %p204
      %p206 = pneg %p205
      // Predicated region
      $region9: #{visual_only_mlm_head.1} parent=5 // pred_check
        _
      $region10: #{visual_only_mlm_head.1} parent=5 // pred_check_branch
        %208 = sbr.rel (%p205) target = $region12
      $region11: #{visual_only_mlm_head.1} parent=5 // pred_region
        %s209 = ssub.s32 %s17, 1
        // Predicated region
        $region13: #{visual_only_mlm_head.1} parent=11 // pred_check
          %p210 = pneg %p64
        $region14: #{visual_only_mlm_head.1} parent=11 // pred_check_branch
          %212 = sbr.rel (%p210) target = $region16
        $region15: #{visual_only_mlm_head.1} parent=11 // pred_region
          _
        $region16: #{visual_only_mlm_head.1} parent=11 // pred_fallthru
          _
        // Predicated region
        $region17: #{visual_only_mlm_head.1} parent=11 // pred_check
          %p213 = pneg %p85
        $region18: #{visual_only_mlm_head.1} parent=11 // pred_check_branch
          %215 = sbr.rel (%p213) target = $region20
        $region19: #{visual_only_mlm_head.1} parent=11 // pred_region
          _
        $region20: #{visual_only_mlm_head.1} parent=11 // pred_fallthru
          _
        // Predicated region
        $region21: #{visual_only_mlm_head.1} parent=11 // pred_check
          %p216 = pneg %p106
        $region22: #{visual_only_mlm_head.1} parent=11 // pred_check_branch
          %218 = sbr.rel (%p216) target = $region24
        $region23: #{visual_only_mlm_head.1} parent=11 // pred_region
          _
        $region24: #{visual_only_mlm_head.1} parent=11 // pred_fallthru
          _
        // Predicated region
        $region25: #{visual_only_mlm_head.1} parent=11 // pred_check
          %p219 = pneg %p127
        $region26: #{visual_only_mlm_head.1} parent=11 // pred_check_branch
          %221 = sbr.rel (%p219) target = $region28
        $region27: #{visual_only_mlm_head.1} parent=11 // pred_region
          _
        $region28: #{visual_only_mlm_head.1} parent=11 // pred_fallthru
          _
        // Predicated region
        $region29: #{visual_only_mlm_head.1} parent=11 // pred_check
          %p222 = pneg %p148
        $region30: #{visual_only_mlm_head.1} parent=11 // pred_check_branch
          %224 = sbr.rel (%p222) target = $region32
        $region31: #{visual_only_mlm_head.1} parent=11 // pred_region
          %s226 = ssub.s32 6144, 6144
          %227 = vsyncadd [#allocation3], %s226
          %s228 = sshll.u32 [#allocation2], 4
          %s229 = int_to_ptr.vmem [resolvable:$true] %s228
          %234 = dma.hbm_to_vmem [thread:$0]  %s5, 6144, %s229, [#allocation3], 1536, 1536, 96
        $region32: #{visual_only_mlm_head.1} parent=11 // pred_fallthru
          _
        // Predicated region
        $region33: #{visual_only_mlm_head.1} parent=11 // pred_check
          %p235 = pneg %p169
        $region34: #{visual_only_mlm_head.1} parent=11 // pred_check_branch
          %237 = sbr.rel (%p235) target = $region36
        $region35: #{visual_only_mlm_head.1} parent=11 // pred_region
          _
        $region36: #{visual_only_mlm_head.1} parent=11 // pred_fallthru
          _
      $region12: #{visual_only_mlm_head.1} parent=5 // pred_fallthru
        _
      %p238 = scmp.lt.s32.totalorder %s17, 2
      // Predicated region
      $region37: #{visual_only_mlm_head.1} parent=5 // pred_check
        %p239 = pneg %p238
      $region38: #{visual_only_mlm_head.1} parent=5 // pred_check_branch
        %241 = sbr.rel (%p239) target = $region40
      $region39: #{visual_only_mlm_head.1} parent=5 // pred_region
        // Predicated region
        $region41: #{visual_only_mlm_head.1} parent=39 // pred_check
          %p242 = pneg %p37
        $region42: #{visual_only_mlm_head.1} parent=39 // pred_check_branch
          %244 = sbr.rel (%p242) target = $region44
        $region43: #{visual_only_mlm_head.1} parent=39 // pred_region
          %p245 = scmp.lt.s32.totalorder %s17, 1
          %s246 = scalar_select %p245, %s17, 1
          %s247 = smul.addr %s246, 8
          %s248 = scalar_lea.vmem %s0, %s247
        $region44: #{visual_only_mlm_head.1} parent=39 // pred_fallthru
          _
      $region40: #{visual_only_mlm_head.1} parent=5 // pred_fallthru
        _
      %p249 = scmp.le.s32.totalorder 1, %s17
      %p250 = scmp.lt.s32.totalorder %s17, 3
      %p251 = pnand %p249, %p250
      %p252 = pneg %p251
      // Predicated region
      $region45: #{visual_only_mlm_head.1} parent=5 // pred_check
        _
      $region46: #{visual_only_mlm_head.1} parent=5 // pred_check_branch
        %254 = sbr.rel (%p251) target = $region48
      $region47: #{visual_only_mlm_head.1} parent=5 // pred_region
        %s255 = ssub.s32 %s17, 1
        // Predicated region
        $region49: #{visual_only_mlm_head.1} parent=47 // pred_check
          %p256 = pneg %p148
        $region50: #{visual_only_mlm_head.1} parent=47 // pred_check_branch
          %258 = sbr.rel (%p256) target = $region52
        $region51: #{visual_only_mlm_head.1} parent=47 // pred_region
          %259 = dma.done [#allocation3], 6144
        $region52: #{visual_only_mlm_head.1} parent=47 // pred_fallthru
          _
        %p260 = scmp.lt.s32.totalorder %s22, 1
        %s261 = scalar_select %p260, %s22, 1
        %s262 = smul.addr %s261, 8
        %s263 = scalar_lea.vmem %s0, %s262
        %p264 = pneg %p43
        %p265 = pneg %p40
        %p266 = pneg %p64
        %p267 = pneg %p61
        %p268 = pneg %p85
        %p269 = pneg %p82
        %p270 = pneg %p106
        %p271 = pneg %p103
        %p272 = pneg %p127
        %p273 = pneg %p124
        %p274 = pneg %p148
        %p275 = pneg %p145
        %p276 = pneg %p169
        %p277 = pneg %p166
        %p278 = pneg %p195
        %p279 = pneg %p192
        %s280 = sand.u32 %s182, 1
        %s281 = scalar_lea.sflag [#allocation4], %s280
        %s282 = sand.u32 %s182, 1
        %s283 = smul.addr %s282, 96
        %s284 = scalar_lea.vmem [#allocation5], %s283
        %p285 = scmp.lt.s32.totalorder %s22, 1
        %s286 = scalar_select %p285, %s22, 1
        %s287 = smul.addr %s286, 8
        %s288 = scalar_lea.vmem %s0, %s287
        %v289 = vld [vmem:[%s288] sm:$0xff]
        %v290 = vld [vmem:[%s1] sm:$0xff]
        %v291 = vld [vmem:[%s1 + $0x8] sm:$0xff]
        %v292 = vld [vmem:[%s1 + $0x10] sm:$0xff]
        %v293 = vld [vmem:[%s1 + $0x18] sm:$0xff]
        %v294 = vld [vmem:[%s2] sm:$0x1]
        %v296 = vlaneseq
        %v297 = vshrl.u32 %v296, 7
        %v298 = vsub.s32 0, %v297
        %v299 = vrot.slane %v294, %v298
        %vm301 = vcmask 261120
        %v303 = vsel %vm301, %v289, 0
        %305 = vmatprep.subr.mxu0 0.0
        %306 = vmatpush1.msra.mxu0 %v290
        %307 = vmatprep.subr.mxu0 0.0
        %308 = vmatpush1.msra.mxu0 %v291
        %309 = vmatprep.subr.mxu0 0.0
        %310 = vmatpush1.msra.mxu0 %v292
        %311 = vmatprep.subr.mxu0 0.0
        %312 = vmatpush1.msra.mxu0 %v293
        %313 = vmatprep.subr.mxu0 0.0
        %314 = vmatpush1.msra.mxu0 0.0
        %315 = vmatprep.subr.mxu0 0.0
        %316 = vmatpush1.msra.mxu0 0.0
        %317 = vmatprep.subr.mxu0 0.0
        %318 = vmatpush1.msra.mxu0 0.0
        %319 = vmatprep.subr.mxu0 0.0
        %320 = vmatpush1.msra.mxu0 0.0
        %321 = vmatprep.subr.mxu0 0.0
        %322 = vmatpush1.msra.mxu0 0.0
        %323 = vmatprep.subr.mxu0 0.0
        %324 = vmatpush1.msra.mxu0 0.0
        %325 = vmatprep.subr.mxu0 0.0
        %326 = vmatpush1.msra.mxu0 0.0
        %327 = vmatprep.subr.mxu0 0.0
        %328 = vmatpush1.msra.mxu0 0.0
        %329 = vmatprep.subr.mxu0 0.0
        %330 = vmatpush1.msra.mxu0 0.0
        %331 = vmatprep.subr.mxu0 0.0
        %332 = vmatpush1.msra.mxu0 0.0
        %333 = vmatprep.subr.mxu0 0.0
        %334 = vmatpush1.msra.mxu0 0.0
        %335 = vmatprep.subr.mxu0 0.0
        %336 = vmatpush1.msra.mxu0 0.0
        %337 = vmatprep.subr.mxu0 0.0
        %338 = vmatpush1.msra.mxu0 0.0
        %339 = vmatprep.subr.mxu0 0.0
        %340 = vmatpush1.msra.mxu0 0.0
        %341 = vmatprep.subr.mxu0 0.0
        %342 = vmatpush1.msra.mxu0 0.0
        %343 = vmatprep.subr.mxu0 0.0
        %344 = vmatpush1.msra.mxu0 0.0
        %345 = vmatprep.subr.mxu0 0.0
        %346 = vmatpush1.msra.mxu0 0.0
        %347 = vmatprep.subr.mxu0 0.0
        %348 = vmatpush1.msra.mxu0 0.0
        %349 = vmatprep.subr.mxu0 0.0
        %350 = vmatpush1.msra.mxu0 0.0
        %351 = vmatprep.subr.mxu0 0.0
        %352 = vmatpush1.msra.mxu0 0.0
        %353 = vmatprep.subr.mxu0 0.0
        %354 = vmatpush1.msra.mxu0 0.0
        %355 = vmatprep.subr.mxu0 0.0
        %356 = vmatpush1.msra.mxu0 0.0
        %357 = vmatprep.subr.mxu0 0.0
        %358 = vmatpush1.msra.mxu0 0.0
        %359 = vmatprep.subr.mxu0 0.0
        %360 = vmatpush1.msra.mxu0 0.0
        %361 = vmatprep.subr.mxu0 0.0
        %362 = vmatpush1.msra.mxu0 0.0
        %363 = vmatprep.subr.mxu0 0.0
        %364 = vmatpush1.msra.mxu0 0.0
        %365 = vmatprep.subr.mxu0 0.0
        %366 = vmatpush1.msra.mxu0 0.0
        %367 = vmatprep.subr.mxu0 0.0
        %368 = vmatpush1.msra.mxu0 0.0
        %369 = vmatprep.mubr.f32.mxu0 0.0
        %370 = vmatmul.mubr.f32.gmra.mrb[0].mxu0 %v303
        %v371 = vpop.f32.mrb[0].mxu0
        %v372 = vadd.f32 %v299, %v371
        %v373 = vpop.f32.mrb[0].mxu0
        %374 = vdwg.mxu0
        %v375 = vmul.f32 %v372, 0.5
        %v376 = vmul.f32 %v372, 0.70710677
        %v377 = verf.f32.pop %v376
        %v378 = vadd.f32 %v377, 1.0
        %v379 = vmul.f32 %v375, %v378
        %v380 = vsel %vm301, %v379, 0.0
        %381 = vadd.xlane.f32.xlu0 %v380
        %v382 = vpop.xlane.xlu0 %381
        %v383 = vrcp.pop 32.0
        %v384 = vmul.f32 %v382, %v383
        %v385 = vmul.f32 %v379, %v379
        %v386 = vsel %vm301, %v385, 0.0
        %387 = vadd.xlane.f32.xlu0 %v386
        %v388 = vpop.xlane.xlu0 %387
        %v389 = vmul.f32 %v388, %v383
        %v390 = vmul.f32 %v384, %v384
        %v391 = vsub.f32 %v389, %v390
        %v392 = vmax.f32 %v391, 0.0
        %v393 = vsub.f32 %v379, %v384
        %v394 = vadd.f32 %v392, 1e-12
        %v395 = vrsqrt.pop %v394
        %v396 = vmul.f32 %v393, %v395
        %v397 = vld [vmem:[%s3] sm:$0x1]
        %v399 = vlaneseq
        %v400 = vshrl.u32 %v399, 7
        %v401 = vsub.s32 0, %v400
        %v402 = vrot.slane %v397, %v401
        %v404 = vmul.f32 %v396, %v402
        %v405 = vld [vmem:[%s4] sm:$0x1]
        %v407 = vlaneseq
        %v408 = vshrl.u32 %v407, 7
        %v409 = vsub.s32 0, %v408
        %v410 = vrot.slane %v405, %v409
        %v412 = vadd.f32 %v404, %v410
        %v413 = vld [vmem:[#allocation2] sm:$0xff]
        %v414 = vld [vmem:[#allocation2 + $0x8] sm:$0xff]
        %v415 = vld [vmem:[#allocation2 + $0x10] sm:$0xff]
        %v416 = vld [vmem:[#allocation2 + $0x18] sm:$0xff]
        %v417 = vld [vmem:[#allocation2 + $0x20] sm:$0xff]
        %v418 = vld [vmem:[#allocation2 + $0x28] sm:$0xff]
        %v419 = vld [vmem:[#allocation2 + $0x30] sm:$0xff]
        %v420 = vld [vmem:[#allocation2 + $0x38] sm:$0xff]
        %v421 = vld [vmem:[#allocation2 + $0x40] sm:$0xff]
        %v422 = vld [vmem:[#allocation2 + $0x48] sm:$0xff]
        %v423 = vld [vmem:[#allocation2 + $0x50] sm:$0xff]
        %v424 = vld [vmem:[#allocation2 + $0x58] sm:$0xff]
        %v425 = vld [vmem:[#allocation2 + $0x60] sm:$0xff]
        %v426 = vld [vmem:[#allocation2 + $0x68] sm:$0xff]
        %v427 = vld [vmem:[#allocation2 + $0x70] sm:$0xff]
        %v428 = vld [vmem:[#allocation2 + $0x78] sm:$0xff]
        %v429 = vld [vmem:[#allocation2 + $0x80] sm:$0xff]
        %v430 = vld [vmem:[#allocation2 + $0x88] sm:$0xff]
        %v431 = vld [vmem:[#allocation2 + $0x90] sm:$0xff]
        %v432 = vld [vmem:[#allocation2 + $0x98] sm:$0xff]
        %v433 = vld [vmem:[#allocation2 + $0xa0] sm:$0xff]
        %v434 = vld [vmem:[#allocation2 + $0xa8] sm:$0xff]
        %v435 = vld [vmem:[#allocation2 + $0xb0] sm:$0xff]
        %v436 = vld [vmem:[#allocation2 + $0xb8] sm:$0xff]
        %v437 = vld [vmem:[#allocation2 + $0xc0] sm:$0xff]
        %v438 = vld [vmem:[#allocation2 + $0xc8] sm:$0xff]
        %v439 = vld [vmem:[#allocation2 + $0xd0] sm:$0xff]
        %v440 = vld [vmem:[#allocation2 + $0xd8] sm:$0xff]
        %v441 = vld [vmem:[#allocation2 + $0xe0] sm:$0xff]
        %v442 = vld [vmem:[#allocation2 + $0xe8] sm:$0xff]
        %v443 = vld [vmem:[#allocation2 + $0xf0] sm:$0xff]
        %v444 = vld [vmem:[#allocation2 + $0xf8] sm:$0xff]
        %v445 = vld [vmem:[#allocation2 + $0x100] sm:$0xff]
        %v446 = vld [vmem:[#allocation2 + $0x108] sm:$0xff]
        %v447 = vld [vmem:[#allocation2 + $0x110] sm:$0xff]
        %v448 = vld [vmem:[#allocation2 + $0x118] sm:$0xff]
        %v449 = vld [vmem:[#allocation2 + $0x120] sm:$0xff]
        %v450 = vld [vmem:[#allocation2 + $0x128] sm:$0xff]
        %v451 = vld [vmem:[#allocation2 + $0x130] sm:$0xff]
        %v452 = vld [vmem:[#allocation2 + $0x138] sm:$0xff]
        %v453 = vld [vmem:[#allocation2 + $0x140] sm:$0xff]
        %v454 = vld [vmem:[#allocation2 + $0x148] sm:$0xff]
        %v455 = vld [vmem:[#allocation2 + $0x150] sm:$0xff]
        %v456 = vld [vmem:[#allocation2 + $0x158] sm:$0xff]
        %v457 = vld [vmem:[#allocation2 + $0x160] sm:$0xff]
        %v458 = vld [vmem:[#allocation2 + $0x168] sm:$0xff]
        %v459 = vld [vmem:[#allocation2 + $0x170] sm:$0xff]
        %v460 = vld [vmem:[#allocation2 + $0x178] sm:$0xff]
        %v461 = vld [vmem:[%s6] sm:$0xff]
        %v462 = vld [vmem:[%s6 + $0x8] sm:$0xf]
        %v465 = vlaneseq
        %v466 = vshrl.u32 %v465, 7
        %v467 = vsub.s32 0, %v466
        %v468 = vrot.slane %v461, %v467
        %v469 = vlaneseq
        %v470 = vshrl.u32 %v469, 7
        %v471 = vsub.s32 1, %v470
        %v472 = vrot.slane %v461, %v471
        %v473 = vlaneseq
        %v474 = vshrl.u32 %v473, 7
        %v475 = vsub.s32 2, %v474
        %v476 = vrot.slane %v461, %v475
        %v477 = vlaneseq
        %v478 = vshrl.u32 %v477, 7
        %v479 = vsub.s32 3, %v478
        %v480 = vrot.slane %v461, %v479
        %v481 = vlaneseq
        %v482 = vshrl.u32 %v481, 7
        %v483 = vsub.s32 4, %v482
        %v484 = vrot.slane %v461, %v483
        %v485 = vlaneseq
        %v486 = vshrl.u32 %v485, 7
        %v487 = vsub.s32 5, %v486
        %v488 = vrot.slane %v461, %v487
        %v489 = vlaneseq
        %v490 = vshrl.u32 %v489, 7
        %v491 = vsub.s32 6, %v490
        %v492 = vrot.slane %v461, %v491
        %v493 = vlaneseq
        %v494 = vshrl.u32 %v493, 7
        %v495 = vsub.s32 7, %v494
        %v496 = vrot.slane %v461, %v495
        %v497 = vlaneseq
        %v498 = vshrl.u32 %v497, 7
        %v499 = vsub.s32 0, %v498
        %v500 = vrot.slane %v462, %v499
        %v501 = vlaneseq
        %v502 = vshrl.u32 %v501, 7
        %v503 = vsub.s32 1, %v502
        %v504 = vrot.slane %v462, %v503
        %v505 = vlaneseq
        %v506 = vshrl.u32 %v505, 7
        %v507 = vsub.s32 2, %v506
        %v508 = vrot.slane %v462, %v507
        %v509 = vlaneseq
        %v510 = vshrl.u32 %v509, 7
        %v511 = vsub.s32 3, %v510
        %v512 = vrot.slane %v462, %v511
        %v526 = vsel %vm301, %v412, 0
        %528 = vmatprep.subr.mxu0 %v414
        %529 = vmatpush1.msra.mxu0 %v413
        %530 = vmatprep.subr.mxu0 %v426
        %531 = vmatpush1.msra.mxu0 %v425
        %532 = vmatprep.subr.mxu0 %v438
        %533 = vmatpush1.msra.mxu0 %v437
        %534 = vmatprep.subr.mxu0 %v450
        %535 = vmatpush1.msra.mxu0 %v449
        %536 = vmatprep.subr.mxu0 0.0
        %537 = vmatpush1.msra.mxu0 0.0
        %538 = vmatprep.subr.mxu0 0.0
        %539 = vmatpush1.msra.mxu0 0.0
        %540 = vmatprep.subr.mxu0 0.0
        %541 = vmatpush1.msra.mxu0 0.0
        %542 = vmatprep.subr.mxu0 0.0
        %543 = vmatpush1.msra.mxu0 0.0
        %544 = vmatprep.subr.mxu0 0.0
        %545 = vmatpush1.msra.mxu0 0.0
        %546 = vmatprep.subr.mxu0 0.0
        %547 = vmatpush1.msra.mxu0 0.0
        %548 = vmatprep.subr.mxu0 0.0
        %549 = vmatpush1.msra.mxu0 0.0
        %550 = vmatprep.subr.mxu0 0.0
        %551 = vmatpush1.msra.mxu0 0.0
        %552 = vmatprep.subr.mxu0 0.0
        %553 = vmatpush1.msra.mxu0 0.0
        %554 = vmatprep.subr.mxu0 0.0
        %555 = vmatpush1.msra.mxu0 0.0
        %556 = vmatprep.subr.mxu0 0.0
        %557 = vmatpush1.msra.mxu0 0.0
        %558 = vmatprep.subr.mxu0 0.0
        %559 = vmatpush1.msra.mxu0 0.0
        %560 = vmatprep.subr.mxu0 0.0
        %561 = vmatpush1.msra.mxu0 0.0
        %562 = vmatprep.subr.mxu0 0.0
        %563 = vmatpush1.msra.mxu0 0.0
        %564 = vmatprep.subr.mxu0 0.0
        %565 = vmatpush1.msra.mxu0 0.0
        %566 = vmatprep.subr.mxu0 0.0
        %567 = vmatpush1.msra.mxu0 0.0
        %568 = vmatprep.subr.mxu0 0.0
        %569 = vmatpush1.msra.mxu0 0.0
        %570 = vmatprep.subr.mxu0 0.0
        %571 = vmatpush1.msra.mxu0 0.0
        %572 = vmatprep.subr.mxu0 0.0
        %573 = vmatpush1.msra.mxu0 0.0
        %574 = vmatprep.subr.mxu0 0.0
        %575 = vmatpush1.msra.mxu0 0.0
        %576 = vmatprep.subr.mxu0 0.0
        %577 = vmatpush1.msra.mxu0 0.0
        %578 = vmatprep.subr.mxu0 0.0
        %579 = vmatpush1.msra.mxu0 0.0
        %580 = vmatprep.subr.mxu0 0.0
        %581 = vmatpush1.msra.mxu0 0.0
        %582 = vmatprep.subr.mxu0 0.0
        %583 = vmatpush1.msra.mxu0 0.0
        %584 = vmatprep.subr.mxu0 0.0
        %585 = vmatpush1.msra.mxu0 0.0
        %586 = vmatprep.subr.mxu0 0.0
        %587 = vmatpush1.msra.mxu0 0.0
        %588 = vmatprep.subr.mxu0 0.0
        %589 = vmatpush1.msra.mxu0 0.0
        %590 = vmatprep.subr.mxu0 0.0
        %591 = vmatpush1.msra.mxu0 0.0
        %592 = vmatprep.mubr.f32.mxu0 0.0
        %593 = vmatmul.mubr.f32.gmra.mrb[0].mxu0 %v526
        %v594 = vpop.f32.mrb[0].mxu0
        %v595 = vadd.f32 %v468, %v594
        %v596 = vpop.f32.mrb[0].mxu0
        %v597 = vadd.f32 %v472, %v596
        %598 = vdwg.mxu0
        %599 = vmatprep.subr.mxu0 %v416
        %600 = vmatpush1.msra.mxu0 %v415
        %601 = vmatprep.subr.mxu0 %v428
        %602 = vmatpush1.msra.mxu0 %v427
        %603 = vmatprep.subr.mxu0 %v440
        %604 = vmatpush1.msra.mxu0 %v439
        %605 = vmatprep.subr.mxu0 %v452
        %606 = vmatpush1.msra.mxu0 %v451
        %607 = vmatprep.subr.mxu0 0.0
        %608 = vmatpush1.msra.mxu0 0.0
        %609 = vmatprep.subr.mxu0 0.0
        %610 = vmatpush1.msra.mxu0 0.0
        %611 = vmatprep.subr.mxu0 0.0
        %612 = vmatpush1.msra.mxu0 0.0
        %613 = vmatprep.subr.mxu0 0.0
        %614 = vmatpush1.msra.mxu0 0.0
        %615 = vmatprep.subr.mxu0 0.0
        %616 = vmatpush1.msra.mxu0 0.0
        %617 = vmatprep.subr.mxu0 0.0
        %618 = vmatpush1.msra.mxu0 0.0
        %619 = vmatprep.subr.mxu0 0.0
        %620 = vmatpush1.msra.mxu0 0.0
        %621 = vmatprep.subr.mxu0 0.0
        %622 = vmatpush1.msra.mxu0 0.0
        %623 = vmatprep.subr.mxu0 0.0
        %624 = vmatpush1.msra.mxu0 0.0
        %625 = vmatprep.subr.mxu0 0.0
        %626 = vmatpush1.msra.mxu0 0.0
        %627 = vmatprep.subr.mxu0 0.0
        %628 = vmatpush1.msra.mxu0 0.0
        %629 = vmatprep.subr.mxu0 0.0
        %630 = vmatpush1.msra.mxu0 0.0
        %631 = vmatprep.subr.mxu0 0.0
        %632 = vmatpush1.msra.mxu0 0.0
        %633 = vmatprep.subr.mxu0 0.0
        %634 = vmatpush1.msra.mxu0 0.0
        %635 = vmatprep.subr.mxu0 0.0
        %636 = vmatpush1.msra.mxu0 0.0
        %637 = vmatprep.subr.mxu0 0.0
        %638 = vmatpush1.msra.mxu0 0.0
        %639 = vmatprep.subr.mxu0 0.0
        %640 = vmatpush1.msra.mxu0 0.0
        %641 = vmatprep.subr.mxu0 0.0
        %642 = vmatpush1.msra.mxu0 0.0
        %643 = vmatprep.subr.mxu0 0.0
        %644 = vmatpush1.msra.mxu0 0.0
        %645 = vmatprep.subr.mxu0 0.0
        %646 = vmatpush1.msra.mxu0 0.0
        %647 = vmatprep.subr.mxu0 0.0
        %648 = vmatpush1.msra.mxu0 0.0
        %649 = vmatprep.subr.mxu0 0.0
        %650 = vmatpush1.msra.mxu0 0.0
        %651 = vmatprep.subr.mxu0 0.0
        %652 = vmatpush1.msra.mxu0 0.0
        %653 = vmatprep.subr.mxu0 0.0
        %654 = vmatpush1.msra.mxu0 0.0
        %655 = vmatprep.subr.mxu0 0.0
        %656 = vmatpush1.msra.mxu0 0.0
        %657 = vmatprep.subr.mxu0 0.0
        %658 = vmatpush1.msra.mxu0 0.0
        %659 = vmatprep.subr.mxu0 0.0
        %660 = vmatpush1.msra.mxu0 0.0
        %661 = vmatprep.subr.mxu0 0.0
        %662 = vmatpush1.msra.mxu0 0.0
        %663 = vmatprep.mubr.f32.mxu0 0.0
        %664 = vmatmul.mubr.f32.gmra.mrb[0].mxu0 %v526
        %v665 = vpop.f32.mrb[0].mxu0
        %v666 = vadd.f32 %v476, %v665
        %v667 = vpop.f32.mrb[0].mxu0
        %v668 = vadd.f32 %v480, %v667
        %669 = vdwg.mxu0
        %670 = vmatprep.subr.mxu0 %v418
        %671 = vmatpush1.msra.mxu0 %v417
        %672 = vmatprep.subr.mxu0 %v430
        %673 = vmatpush1.msra.mxu0 %v429
        %674 = vmatprep.subr.mxu0 %v442
        %675 = vmatpush1.msra.mxu0 %v441
        %676 = vmatprep.subr.mxu0 %v454
        %677 = vmatpush1.msra.mxu0 %v453
        %678 = vmatprep.subr.mxu0 0.0
        %679 = vmatpush1.msra.mxu0 0.0
        %680 = vmatprep.subr.mxu0 0.0
        %681 = vmatpush1.msra.mxu0 0.0
        %682 = vmatprep.subr.mxu0 0.0
        %683 = vmatpush1.msra.mxu0 0.0
        %684 = vmatprep.subr.mxu0 0.0
        %685 = vmatpush1.msra.mxu0 0.0
        %686 = vmatprep.subr.mxu0 0.0
        %687 = vmatpush1.msra.mxu0 0.0
        %688 = vmatprep.subr.mxu0 0.0
        %689 = vmatpush1.msra.mxu0 0.0
        %690 = vmatprep.subr.mxu0 0.0
        %691 = vmatpush1.msra.mxu0 0.0
        %692 = vmatprep.subr.mxu0 0.0
        %693 = vmatpush1.msra.mxu0 0.0
        %694 = vmatprep.subr.mxu0 0.0
        %695 = vmatpush1.msra.mxu0 0.0
        %696 = vmatprep.subr.mxu0 0.0
        %697 = vmatpush1.msra.mxu0 0.0
        %698 = vmatprep.subr.mxu0 0.0
        %699 = vmatpush1.msra.mxu0 0.0
        %700 = vmatprep.subr.mxu0 0.0
        %701 = vmatpush1.msra.mxu0 0.0
        %702 = vmatprep.subr.mxu0 0.0
        %703 = vmatpush1.msra.mxu0 0.0
        %704 = vmatprep.subr.mxu0 0.0
        %705 = vmatpush1.msra.mxu0 0.0
        %706 = vmatprep.subr.mxu0 0.0
        %707 = vmatpush1.msra.mxu0 0.0
        %708 = vmatprep.subr.mxu0 0.0
        %709 = vmatpush1.msra.mxu0 0.0
        %710 = vmatprep.subr.mxu0 0.0
        %711 = vmatpush1.msra.mxu0 0.0
        %712 = vmatprep.subr.mxu0 0.0
        %713 = vmatpush1.msra.mxu0 0.0
        %714 = vmatprep.subr.mxu0 0.0
        %715 = vmatpush1.msra.mxu0 0.0
        %716 = vmatprep.subr.mxu0 0.0
        %717 = vmatpush1.msra.mxu0 0.0
        %718 = vmatprep.subr.mxu0 0.0
        %719 = vmatpush1.msra.mxu0 0.0
        %720 = vmatprep.subr.mxu0 0.0
        %721 = vmatpush1.msra.mxu0 0.0
        %722 = vmatprep.subr.mxu0 0.0
        %723 = vmatpush1.msra.mxu0 0.0
        %724 = vmatprep.subr.mxu0 0.0
        %725 = vmatpush1.msra.mxu0 0.0
        %726 = vmatprep.subr.mxu0 0.0
        %727 = vmatpush1.msra.mxu0 0.0
        %728 = vmatprep.subr.mxu0 0.0
        %729 = vmatpush1.msra.mxu0 0.0
        %730 = vmatprep.subr.mxu0 0.0
        %731 = vmatpush1.msra.mxu0 0.0
        %732 = vmatprep.subr.mxu0 0.0
        %733 = vmatpush1.msra.mxu0 0.0
        %734 = vmatprep.mubr.f32.mxu0 0.0
        %735 = vmatmul.mubr.f32.gmra.mrb[0].mxu0 %v526
        %v736 = vpop.f32.mrb[0].mxu0
        %v737 = vadd.f32 %v484, %v736
        %v738 = vpop.f32.mrb[0].mxu0
        %v739 = vadd.f32 %v488, %v738
        %740 = vdwg.mxu0
        %741 = vmatprep.subr.mxu0 %v420
        %742 = vmatpush1.msra.mxu0 %v419
        %743 = vmatprep.subr.mxu0 %v432
        %744 = vmatpush1.msra.mxu0 %v431
        %745 = vmatprep.subr.mxu0 %v444
        %746 = vmatpush1.msra.mxu0 %v443
        %747 = vmatprep.subr.mxu0 %v456
        %748 = vmatpush1.msra.mxu0 %v455
        %749 = vmatprep.subr.mxu0 0.0
        %750 = vmatpush1.msra.mxu0 0.0
        %751 = vmatprep.subr.mxu0 0.0
        %752 = vmatpush1.msra.mxu0 0.0
        %753 = vmatprep.subr.mxu0 0.0
        %754 = vmatpush1.msra.mxu0 0.0
        %755 = vmatprep.subr.mxu0 0.0
        %756 = vmatpush1.msra.mxu0 0.0
        %757 = vmatprep.subr.mxu0 0.0
        %758 = vmatpush1.msra.mxu0 0.0
        %759 = vmatprep.subr.mxu0 0.0
        %760 = vmatpush1.msra.mxu0 0.0
        %761 = vmatprep.subr.mxu0 0.0
        %762 = vmatpush1.msra.mxu0 0.0
        %763 = vmatprep.subr.mxu0 0.0
        %764 = vmatpush1.msra.mxu0 0.0
        %765 = vmatprep.subr.mxu0 0.0
        %766 = vmatpush1.msra.mxu0 0.0
        %767 = vmatprep.subr.mxu0 0.0
        %768 = vmatpush1.msra.mxu0 0.0
        %769 = vmatprep.subr.mxu0 0.0
        %770 = vmatpush1.msra.mxu0 0.0
        %771 = vmatprep.subr.mxu0 0.0
        %772 = vmatpush1.msra.mxu0 0.0
        %773 = vmatprep.subr.mxu0 0.0
        %774 = vmatpush1.msra.mxu0 0.0
        %775 = vmatprep.subr.mxu0 0.0
        %776 = vmatpush1.msra.mxu0 0.0
        %777 = vmatprep.subr.mxu0 0.0
        %778 = vmatpush1.msra.mxu0 0.0
        %779 = vmatprep.subr.mxu0 0.0
        %780 = vmatpush1.msra.mxu0 0.0
        %781 = vmatprep.subr.mxu0 0.0
        %782 = vmatpush1.msra.mxu0 0.0
        %783 = vmatprep.subr.mxu0 0.0
        %784 = vmatpush1.msra.mxu0 0.0
        %785 = vmatprep.subr.mxu0 0.0
        %786 = vmatpush1.msra.mxu0 0.0
        %787 = vmatprep.subr.mxu0 0.0
        %788 = vmatpush1.msra.mxu0 0.0
        %789 = vmatprep.subr.mxu0 0.0
        %790 = vmatpush1.msra.mxu0 0.0
        %791 = vmatprep.subr.mxu0 0.0
        %792 = vmatpush1.msra.mxu0 0.0
        %793 = vmatprep.subr.mxu0 0.0
        %794 = vmatpush1.msra.mxu0 0.0
        %795 = vmatprep.subr.mxu0 0.0
        %796 = vmatpush1.msra.mxu0 0.0
        %797 = vmatprep.subr.mxu0 0.0
        %798 = vmatpush1.msra.mxu0 0.0
        %799 = vmatprep.subr.mxu0 0.0
        %800 = vmatpush1.msra.mxu0 0.0
        %801 = vmatprep.subr.mxu0 0.0
        %802 = vmatpush1.msra.mxu0 0.0
        %803 = vmatprep.subr.mxu0 0.0
        %804 = vmatpush1.msra.mxu0 0.0
        %805 = vmatprep.mubr.f32.mxu0 0.0
        %806 = vmatmul.mubr.f32.gmra.mrb[0].mxu0 %v526
        %v807 = vpop.f32.mrb[0].mxu0
        %v808 = vadd.f32 %v492, %v807
        %v809 = vpop.f32.mrb[0].mxu0
        %v810 = vadd.f32 %v496, %v809
        %811 = vdwg.mxu0
        %812 = vmatprep.subr.mxu0 %v422
        %813 = vmatpush1.msra.mxu0 %v421
        %814 = vmatprep.subr.mxu0 %v434
        %815 = vmatpush1.msra.mxu0 %v433
        %816 = vmatprep.subr.mxu0 %v446
        %817 = vmatpush1.msra.mxu0 %v445
        %818 = vmatprep.subr.mxu0 %v458
        %819 = vmatpush1.msra.mxu0 %v457
        %820 = vmatprep.subr.mxu0 0.0
        %821 = vmatpush1.msra.mxu0 0.0
        %822 = vmatprep.subr.mxu0 0.0
        %823 = vmatpush1.msra.mxu0 0.0
        %824 = vmatprep.subr.mxu0 0.0
        %825 = vmatpush1.msra.mxu0 0.0
        %826 = vmatprep.subr.mxu0 0.0
        %827 = vmatpush1.msra.mxu0 0.0
        %828 = vmatprep.subr.mxu0 0.0
        %829 = vmatpush1.msra.mxu0 0.0
        %830 = vmatprep.subr.mxu0 0.0
        %831 = vmatpush1.msra.mxu0 0.0
        %832 = vmatprep.subr.mxu0 0.0
        %833 = vmatpush1.msra.mxu0 0.0
        %834 = vmatprep.subr.mxu0 0.0
        %835 = vmatpush1.msra.mxu0 0.0
        %836 = vmatprep.subr.mxu0 0.0
        %837 = vmatpush1.msra.mxu0 0.0
        %838 = vmatprep.subr.mxu0 0.0
        %839 = vmatpush1.msra.mxu0 0.0
        %840 = vmatprep.subr.mxu0 0.0
        %841 = vmatpush1.msra.mxu0 0.0
        %842 = vmatprep.subr.mxu0 0.0
        %843 = vmatpush1.msra.mxu0 0.0
        %844 = vmatprep.subr.mxu0 0.0
        %845 = vmatpush1.msra.mxu0 0.0
        %846 = vmatprep.subr.mxu0 0.0
        %847 = vmatpush1.msra.mxu0 0.0
        %848 = vmatprep.subr.mxu0 0.0
        %849 = vmatpush1.msra.mxu0 0.0
        %850 = vmatprep.subr.mxu0 0.0
        %851 = vmatpush1.msra.mxu0 0.0
        %852 = vmatprep.subr.mxu0 0.0
        %853 = vmatpush1.msra.mxu0 0.0
        %854 = vmatprep.subr.mxu0 0.0
        %855 = vmatpush1.msra.mxu0 0.0
        %856 = vmatprep.subr.mxu0 0.0
        %857 = vmatpush1.msra.mxu0 0.0
        %858 = vmatprep.subr.mxu0 0.0
        %859 = vmatpush1.msra.mxu0 0.0
        %860 = vmatprep.subr.mxu0 0.0
        %861 = vmatpush1.msra.mxu0 0.0
        %862 = vmatprep.subr.mxu0 0.0
        %863 = vmatpush1.msra.mxu0 0.0
        %864 = vmatprep.subr.mxu0 0.0
        %865 = vmatpush1.msra.mxu0 0.0
        %866 = vmatprep.subr.mxu0 0.0
        %867 = vmatpush1.msra.mxu0 0.0
        %868 = vmatprep.subr.mxu0 0.0
        %869 = vmatpush1.msra.mxu0 0.0
        %870 = vmatprep.subr.mxu0 0.0
        %871 = vmatpush1.msra.mxu0 0.0
        %872 = vmatprep.subr.mxu0 0.0
        %873 = vmatpush1.msra.mxu0 0.0
        %874 = vmatprep.subr.mxu0 0.0
        %875 = vmatpush1.msra.mxu0 0.0
        %876 = vmatprep.mubr.f32.mxu0 0.0
        %877 = vmatmul.mubr.f32.gmra.mrb[0].mxu0 %v526
        %v878 = vpop.f32.mrb[0].mxu0
        %v879 = vadd.f32 %v500, %v878
        %v880 = vpop.f32.mrb[0].mxu0
        %v881 = vadd.f32 %v504, %v880
        %882 = vdwg.mxu0
        %883 = vmatprep.subr.mxu0 %v424
        %884 = vmatpush1.msra.mxu0 %v423
        %885 = vmatprep.subr.mxu0 %v436
        %886 = vmatpush1.msra.mxu0 %v435
        %887 = vmatprep.subr.mxu0 %v448
        %888 = vmatpush1.msra.mxu0 %v447
        %889 = vmatprep.subr.mxu0 %v460
        %890 = vmatpush1.msra.mxu0 %v459
        %891 = vmatprep.subr.mxu0 0.0
        %892 = vmatpush1.msra.mxu0 0.0
        %893 = vmatprep.subr.mxu0 0.0
        %894 = vmatpush1.msra.mxu0 0.0
        %895 = vmatprep.subr.mxu0 0.0
        %896 = vmatpush1.msra.mxu0 0.0
        %897 = vmatprep.subr.mxu0 0.0
        %898 = vmatpush1.msra.mxu0 0.0
        %899 = vmatprep.subr.mxu0 0.0
        %900 = vmatpush1.msra.mxu0 0.0
        %901 = vmatprep.subr.mxu0 0.0
        %902 = vmatpush1.msra.mxu0 0.0
        %903 = vmatprep.subr.mxu0 0.0
        %904 = vmatpush1.msra.mxu0 0.0
        %905 = vmatprep.subr.mxu0 0.0
        %906 = vmatpush1.msra.mxu0 0.0
        %907 = vmatprep.subr.mxu0 0.0
        %908 = vmatpush1.msra.mxu0 0.0
        %909 = vmatprep.subr.mxu0 0.0
        %910 = vmatpush1.msra.mxu0 0.0
        %911 = vmatprep.subr.mxu0 0.0
        %912 = vmatpush1.msra.mxu0 0.0
        %913 = vmatprep.subr.mxu0 0.0
        %914 = vmatpush1.msra.mxu0 0.0
        %915 = vmatprep.subr.mxu0 0.0
        %916 = vmatpush1.msra.mxu0 0.0
        %917 = vmatprep.subr.mxu0 0.0
        %918 = vmatpush1.msra.mxu0 0.0
        %919 = vmatprep.subr.mxu0 0.0
        %920 = vmatpush1.msra.mxu0 0.0
        %921 = vmatprep.subr.mxu0 0.0
        %922 = vmatpush1.msra.mxu0 0.0
        %923 = vmatprep.subr.mxu0 0.0
        %924 = vmatpush1.msra.mxu0 0.0
        %925 = vmatprep.subr.mxu0 0.0
        %926 = vmatpush1.msra.mxu0 0.0
        %927 = vmatprep.subr.mxu0 0.0
        %928 = vmatpush1.msra.mxu0 0.0
        %929 = vmatprep.subr.mxu0 0.0
        %930 = vmatpush1.msra.mxu0 0.0
        %931 = vmatprep.subr.mxu0 0.0
        %932 = vmatpush1.msra.mxu0 0.0
        %933 = vmatprep.subr.mxu0 0.0
        %934 = vmatpush1.msra.mxu0 0.0
        %935 = vmatprep.subr.mxu0 0.0
        %936 = vmatpush1.msra.mxu0 0.0
        %937 = vmatprep.subr.mxu0 0.0
        %938 = vmatpush1.msra.mxu0 0.0
        %939 = vmatprep.subr.mxu0 0.0
        %940 = vmatpush1.msra.mxu0 0.0
        %941 = vmatprep.subr.mxu0 0.0
        %942 = vmatpush1.msra.mxu0 0.0
        %943 = vmatprep.subr.mxu0 0.0
        %944 = vmatpush1.msra.mxu0 0.0
        %945 = vmatprep.subr.mxu0 0.0
        %946 = vmatpush1.msra.mxu0 0.0
        %947 = vmatprep.mubr.f32.mxu0 0.0
        %948 = vmatmul.mubr.f32.gmra.mrb[0].mxu0 %v526
        %v949 = vpop.f32.mrb[0].mxu0
        %v950 = vadd.f32 %v508, %v949
        %v951 = vpop.f32.mrb[0].mxu0
        %v952 = vadd.f32 %v512, %v951
        %953 = vdwg.mxu0
        %954 = vst [vmem:[%s284] sm:$0xff] %v595
        %955 = vst [vmem:[%s284 + $0x8] sm:$0xff] %v597
        %956 = vst [vmem:[%s284 + $0x10] sm:$0xff] %v666
        %957 = vst [vmem:[%s284 + $0x18] sm:$0xff] %v668
        %958 = vst [vmem:[%s284 + $0x20] sm:$0xff] %v737
        %959 = vst [vmem:[%s284 + $0x28] sm:$0xff] %v739
        %960 = vst [vmem:[%s284 + $0x30] sm:$0xff] %v808
        %961 = vst [vmem:[%s284 + $0x38] sm:$0xff] %v810
        %962 = vst [vmem:[%s284 + $0x40] sm:$0xff] %v879
        %963 = vst [vmem:[%s284 + $0x48] sm:$0xff] %v881
        %964 = vst [vmem:[%s284 + $0x50] sm:$0xff] %v950
        %965 = vst [vmem:[%s284 + $0x58] sm:$0xff] %v952
        %s966 = sand.u32 %s182, 1
        %s967 = scalar_lea.sflag [#allocation4], %s966
        %s968 = sand.u32 %s182, 1
        %s969 = smul.addr %s968, 96
        %s970 = scalar_lea.vmem [#allocation5], %s969
        // Predicated region
        $region53: #{visual_only_mlm_head.1} parent=47 // pred_check
          %p971 = pneg %p192
        $region54: #{visual_only_mlm_head.1} parent=47 // pred_check_branch
          %973 = sbr.rel (%p971) target = $region56
        $region55: #{visual_only_mlm_head.1} parent=47 // pred_region
          %s975 = ssub.s32 1536, 1536
          %976 = vsyncadd %s967, %s975
          %s977 = smul.addr %s22, 12
          %s978 = smul.addr %s977, 128
          %s979 = scalar_lea.hbm %s7, %s978
          %s981 = sshll.u32 %s970, 4
          %s982 = int_to_ptr.vmem [resolvable:$true] %s981
          %984 = dma.vmem_to_hbm [thread:$0]  %s982, 1536, %s979, %s967
        $region56: #{visual_only_mlm_head.1} parent=47 // pred_fallthru
          _
      $region48: #{visual_only_mlm_head.1} parent=5 // pred_fallthru
        _
      %p985 = scmp.le.s32.totalorder 2, %s17
      // Predicated region
      $region57: #{visual_only_mlm_head.1} parent=5 // pred_check
        %p986 = pneg %p985
      $region58: #{visual_only_mlm_head.1} parent=5 // pred_check_branch
        %988 = sbr.rel (%p986) target = $region60
      $region59: #{visual_only_mlm_head.1} parent=5 // pred_region
        %s989 = ssub.s32 %s17, 2
        // Predicated region
        $region61: #{visual_only_mlm_head.1} parent=59 // pred_check
          %p990 = pneg %p198
        $region62: #{visual_only_mlm_head.1} parent=59 // pred_check_branch
          %992 = sbr.rel (%p990) target = $region64
        $region63: #{visual_only_mlm_head.1} parent=59 // pred_region
          %s993 = sand.u32 %s183, 1
          %s994 = scalar_lea.sflag [#allocation4], %s993
          %s995 = sand.u32 %s183, 1
          %s996 = smul.addr %s995, 96
          %s997 = scalar_lea.vmem [#allocation5], %s996
          %998 = dma.done %s994, 1536
        $region64: #{visual_only_mlm_head.1} parent=59 // pred_fallthru
          _
      $region60: #{visual_only_mlm_head.1} parent=5 // pred_fallthru
        _
    $region6: #{visual_only_mlm_head.1} parent=1 // loop_footer
      %s21 = sadd.s32 1, %s17
    $region7: #{visual_only_mlm_head.1} parent=1 // loop_footer_branch
      %16 = sbr.rel target = $region3
    $region8: #{visual_only_mlm_head.1} parent=1 // loop_exit
      _
    %999 = vsyncpa [#allocation3], 1
    %s1000 = scalar_lea.sflag [#allocation3], 1
    %1001 = vsyncpa %s1000, 1
    %1002 = vsyncpa [#allocation4], 1
    %s1003 = scalar_lea.sflag [#allocation4], 1
    %1004 = vsyncpa %s1003, 1

</llo_original>
